<compile_context>
chip_gen: v5e
topology: v5e:2x2
jax: 0.10.0
libtpu: 0.0.40
codegen_flags: <defaults>
</compile_context>

<pallas_src>
import math
from functools import partial

import jax
import jax.numpy as jnp
from jax import lax
from jax.experimental import pallas as pl
from jax.experimental.pallas import tpu as pltpu

_LANE = 128
# Total 128-lane rows (outer-block x row-tile) per grid step.  1024 rows of f32 is
# at the measured ~85% HBM-roofline plateau and keeps the double-buffered footprint
# (~4 MiB + temporaries) safe even under v5e's 16 MiB scoped-VMEM default.
_ROWS_PER_STEP_TARGET = 1024


def _sublane_quantum(dtype) -> int:
    # f32 -> 8, bf16/f16 -> 16, int8/fp8 -> 32 (nicer packing for narrow dtypes).
    return max(8, 32 // jnp.dtype(dtype).itemsize)


def _pick_row_tile(rows: int, quantum: int, target: int) -> int:
    """Largest row tile <= target; prefer an exact divisor of `rows` (no masked
    boundary block), otherwise keep the big tile and let Pallas mask the last block."""
    if rows <= target:
        return rows  # full extent is always a legal block size
    t = target - (target % quantum)
    tt = t
    while tt >= quantum:
        if rows % tt == 0:
            if tt >= target // 2:
                return tt
            break
        tt -= quantum
    return max(t, quantum)


def _pick_tiling(outer: int, rows: int, quantum: int):
    """Choose (outer_block, row_tile) so each grid step moves ~_ROWS_PER_STEP_TARGET
    rows and the grid has >=2 steps (both v7x TensorCores busy) whenever splittable."""
    tile_rows = _pick_row_tile(rows, quantum, min(rows, _ROWS_PER_STEP_TARGET))
    bo = max(1, min(outer, _ROWS_PER_STEP_TARGET // max(tile_rows, 1)))
    n_out = -(-outer // bo)
    n_row = -(-rows // tile_rows)
    if n_out * n_row < 2:
        if outer >= 2:
            bo = (outer + 1) // 2           # split the outer axis (keeps row tiles big)
        elif rows >= 2 * quantum:
            tile_rows = -(-(rows // 2) // quantum) * quantum  # split rows instead
    return bo, tile_rows


def _dg_sample_kernel(mean_ref, logvar_ref, noise_ref, out_ref):
    """out = mean + exp(0.5 * logvar) * noise  (math in f32, I/O in caller dtype)."""
    mean = mean_ref[...].astype(jnp.float32)      # (bo, tile_rows, 128)
    logvar = logvar_ref[...].astype(jnp.float32)  # (bo, tile_rows, 128)
    std = jnp.exp(0.5 * logvar)                   # EUP; hidden under HBM traffic
    out = mean + std * noise_ref[...].astype(jnp.float32)
    out_ref[...] = out.astype(out_ref.dtype)


@partial(jax.jit, static_argnames=("sample", "chunk_dim"))
def diagonal_gaussian_original(z, key=None, *, sample: bool = True, chunk_dim: int = 1):
    """JAX/Pallas equivalent of DiagonalGaussianOriginal.forward.

    `key` (jax.random key) replaces torch's global RNG state; callers must thread
    distinct keys to get distinct samples across calls.
    """
    nd = z.ndim
    d = chunk_dim % nd
    c2 = z.shape[d]
    assert c2 % 2 == 0, "chunk dimension must be even"
    c = c2 // 2

    if not sample:
        return lax.slice_in_dim(z, 0, c, axis=d)

    if key is None:
        key = jax.random.PRNGKey(0)

    out_final_shape = z.shape[:d] + (c,) + z.shape[d + 1:]
    outer = math.prod(z.shape[:d])
    inner = math.prod(z.shape[d + 1:])
    n = c * inner  # elements per half per outer slice

    if n % _LANE != 0:
        # TODO(synk): ragged per-half size (n % 128 != 0) uses the fused XLA path
        # instead of a masked-tail Pallas kernel; avoids the old pad+slice extra copies.
        mean = lax.slice_in_dim(z, 0, c, axis=d)
        logvar = lax.slice_in_dim(z, c, c2, axis=d)
        noise = jax.random.normal(key, mean.shape, dtype=z.dtype)
        out = (mean.astype(jnp.float32)
               + jnp.exp(0.5 * logvar.astype(jnp.float32)) * noise.astype(jnp.float32))
        return out.astype(z.dtype)

    rows = n // _LANE
    # Copy-free row-major view: axis 1 is the mean/logvar chunk; each half is a
    # lane-dense (rows, 128) slab.
    z4 = z.reshape(outer, 2, rows, _LANE)

    quantum = _sublane_quantum(z.dtype)
    bo, tile_rows = _pick_tiling(outer, rows, quantum)
    grid = (-(-outer // bo), -(-rows // tile_rows))

    # Noise drawn with the stock JAX PRNG (same distribution as torch.randn_like,
    # different bits).  Shaped lane-dense to match the output slab.
    noise = jax.random.normal(key, (outer, rows, _LANE), dtype=z.dtype)

    n_mean = outer * rows * _LANE
    itemsize = jnp.dtype(z.dtype).itemsize
    cost = pl.CostEstimate(
        flops=3 * n_mean,               # 0.5*logvar, std*noise, mean+...
        transcendentals=n_mean,         # exp
        bytes_accessed=4 * n_mean * itemsize,  # read mean+logvar+noise, write out
    )

    out3 = pl.pallas_call(
        _dg_sample_kernel,
        out_shape=jax.ShapeDtypeStruct((outer, rows, _LANE), z.dtype),
        grid_spec=pltpu.PrefetchScalarGridSpec(
            num_scalar_prefetch=0,
            grid=grid,
            in_specs=[
                # mean half: contiguous strips of z4[:, 0]
                pl.BlockSpec((bo, None, tile_rows, _LANE), lambda o, j: (o, 0, j, 0)),
                # logvar half: contiguous strips of z4[:, 1]
                pl.BlockSpec((bo, None, tile_rows, _LANE), lambda o, j: (o, 1, j, 0)),
                # noise
                pl.BlockSpec((bo, tile_rows, _LANE), lambda o, j: (o, j, 0)),
            ],
            out_specs=pl.BlockSpec((bo, tile_rows, _LANE), lambda o, j: (o, j, 0)),
        ),
        compiler_params=pltpu.CompilerParams(
            dimension_semantics=("parallel", "parallel"),
        ),
        cost_estimate=cost,
    )(z4, z4, noise)

    return out3.reshape(out_final_shape)


if __name__ == "__main__":
    key = jax.random.PRNGKey(0)
    kz, kn1, kn2 = jax.random.split(key, 3)

    B, C2, H, W = 2, 8, 16, 16  # NCHW; chunk along dim=1 halves channels (8 -> 4)
    z = jax.random.normal(kz, (B, C2, H, W), dtype=jnp.float32)

    out = jax.block_until_ready(diagonal_gaussian_original(z, kn1, sample=True, chunk_dim=1))

    mean, logvar = jnp.split(z, 2, axis=1)
    assert out.shape == (B, C2 // 2, H, W)
    assert bool(jnp.all(jnp.isfinite(out)))

    # Deterministic path must return the mean half exactly.
    out_det = jax.block_until_ready(
        diagonal_gaussian_original(z, kn1, sample=False, chunk_dim=1))
    assert bool(jnp.array_equal(out_det, mean))

    # Exact cross-check: rebuild the noise the kernel consumed and apply the formula.
    rows = (C2 // 2) * H * W // 128
    ref_noise = jax.random.normal(kn1, (B, rows, 128), dtype=z.dtype).reshape(mean.shape)
    ref = mean + jnp.exp(0.5 * logvar) * ref_noise
    assert bool(jnp.allclose(out, ref, atol=1e-3, rtol=1e-3))

    # Recovered noise = (out - mean) / std should look standard normal.
    noise = (out - mean) * jnp.exp(-0.5 * logvar)
    assert abs(float(noise.mean())) < 0.15            # ~6.8 sigma for 2048 samples
    assert abs(float(noise.std()) - 1.0) < 0.15

    # Different keys must give different samples.
    out2 = jax.block_until_ready(
        diagonal_gaussian_original(z, kn2, sample=True, chunk_dim=1))
    assert not bool(jnp.allclose(out, out2))

    print("KERNEL_OK")
</pallas_src>

<mosaic_0001>
module attributes {stable_mosaic.version = 11 : i64} {
  func.func @_dg_sample_kernel(%arg0: i32, %arg1: i32, %arg2: memref<1x1x8x128xf32, #tpu.memory_space<vmem>>, %arg3: memref<1x1x8x128xf32, #tpu.memory_space<vmem>>, %arg4: memref<1x8x128xf32, #tpu.memory_space<vmem>>, %arg5: memref<1x8x128xf32, #tpu.memory_space<vmem>>) attributes {dimension_semantics = [#tpu.dimension_semantics<parallel>, #tpu.dimension_semantics<parallel>], iteration_bounds = array<i64: 2, 1>, scalar_prefetch = 0 : i64, scratch_operands = 0 : i64, tpu.core_type = #tpu.core_type<tc>, window_params = [{transform_indices = @transform_0, window_bounds = array<i64: 1, 1, 8, 128>}, {transform_indices = @transform_1, window_bounds = array<i64: 1, 1, 8, 128>}, {transform_indices = @transform_2, window_bounds = array<i64: 1, 8, 128>}, {transform_indices = @transform_3, window_bounds = array<i64: 1, 8, 128>}]} {
    %c0 = arith.constant 0 : index
    %c0_0 = arith.constant 0 : index
    %c0_1 = arith.constant 0 : index
    %c0_2 = arith.constant 0 : index
    %0 = vector.load %arg2[%c0, %c0_0, %c0_1, %c0_2] : memref<1x1x8x128xf32, #tpu.memory_space<vmem>>, vector<1x1x8x128xf32>
    %1 = vector.shape_cast %0 : vector<1x1x8x128xf32> to vector<1x8x128xf32>
    %c0_3 = arith.constant 0 : index
    %c0_4 = arith.constant 0 : index
    %c0_5 = arith.constant 0 : index
    %c0_6 = arith.constant 0 : index
    %2 = vector.load %arg3[%c0_3, %c0_4, %c0_5, %c0_6] : memref<1x1x8x128xf32, #tpu.memory_space<vmem>>, vector<1x1x8x128xf32>
    %3 = vector.shape_cast %2 : vector<1x1x8x128xf32> to vector<1x8x128xf32>
    %cst = arith.constant 5.000000e-01 : f32
    %4 = vector.broadcast %cst : f32 to vector<1x8x128xf32>
    %5 = arith.mulf %4, %3 : vector<1x8x128xf32>
    %6 = math.exp %5 : vector<1x8x128xf32>
    %c0_7 = arith.constant 0 : index
    %c0_8 = arith.constant 0 : index
    %c0_9 = arith.constant 0 : index
    %7 = vector.load %arg4[%c0_7, %c0_8, %c0_9] : memref<1x8x128xf32, #tpu.memory_space<vmem>>, vector<1x8x128xf32>
    %8 = arith.mulf %6, %7 : vector<1x8x128xf32>
    %9 = arith.addf %1, %8 : vector<1x8x128xf32>
    %c0_10 = arith.constant 0 : index
    %c0_11 = arith.constant 0 : index
    %c0_12 = arith.constant 0 : index
    %10 = vector.load %arg5[%c0_10, %c0_11, %c0_12] : memref<1x8x128xf32, #tpu.memory_space<vmem>>, vector<1x8x128xf32>
    tpu.vector_store %arg5[%c0_10, %c0_11, %c0_12], %9 {strides = array<i32>} : memref<1x8x128xf32, #tpu.memory_space<vmem>>, vector<1x8x128xf32>,
    return
  }
  func.func @transform_0(%arg0: i32, %arg1: i32) -> (i32, i32, i32, i32) {
    %c0_i32 = arith.constant 0 : i32
    %c0_i32_0 = arith.constant 0 : i32
    %c0_i32_1 = arith.constant 0 : i32
    return %arg0, %c0_i32, %arg1, %c0_i32_0 : i32, i32, i32, i32
  }
  func.func @transform_1(%arg0: i32, %arg1: i32) -> (i32, i32, i32, i32) {
    %c1_i32 = arith.constant 1 : i32
    %c0_i32 = arith.constant 0 : i32
    %c0_i32_0 = arith.constant 0 : i32
    return %arg0, %c1_i32, %arg1, %c0_i32 : i32, i32, i32, i32
  }
  func.func @transform_2(%arg0: i32, %arg1: i32) -> (i32, i32, i32) {
    %c0_i32 = arith.constant 0 : i32
    %c0_i32_0 = arith.constant 0 : i32
    return %arg0, %arg1, %c0_i32 : i32, i32, i32
  }
  func.func @transform_3(%arg0: i32, %arg1: i32) -> (i32, i32, i32) {
    %c0_i32 = arith.constant 0 : i32
    %c0_i32_0 = arith.constant 0 : i32
    return %arg0, %arg1, %c0_i32 : i32, i32, i32
  }
}

</mosaic_0001>

<llo_original>
// kernel: diagonal_gaussian_original.1
$region0: #{diagonal_gaussian_original.1}
  #allocation0 [shape = 'u32[]', space=smem, size = 0x4, offset = 0x4, fixed_abs, tag = 'smem constant byte address 0x4 - core index']
  #allocation1 [shape = 'u32[72,128]{1,0:T(1,128)}', space=vmem, size = 0x9000, scoped, tag = 'internal scratch']
  %s0 = inlined_call_operand.vmem [shape: f32[2,2,8,128], index: 0, kind: input, shape index: {}, may-alias: {0,1}]
  %s1 = inlined_call_operand.vmem [shape: f32[2,2,8,128], index: 1, kind: input, shape index: {}, may-alias: {0,1}]
  %s2 = inlined_call_operand.vmem [shape: f32[2,8,128], index: 2, kind: input, shape index: {}]
  %s3 = inlined_call_operand.vmem [shape: f32[2,8,128], index: 3, kind: output, shape index: {}]
  %s4 = sld [smem:[#allocation0]]
  $region45: #{diagonal_gaussian_original.1} parent=0
    _
  %s6 = ssub.s32 1, %s4
  %s7 = scalar_select 0, %s6, %s4
  loop: start=0, step=1, limit=4
  $region2: #{diagonal_gaussian_original.1} parent=0 // loop_pre_header
    _
  $region3: #{diagonal_gaussian_original.1} parent=0 // loop_header
    %s9 = sphi 0, %s13
    %p10 = scmp.ge.s32.totalorder %s9, 4
    %s16 = sphi 0, %s28
    %s17 = sphi 0, %s24
    %s18 = sphi 0, %s16
    %s19 = sphi 0, %s17
    %s20 = sphi 0, %s18
    %s21 = sphi 0, %s19
    %s33 = sphi 0, %s35
    %s36 = sphi 0, %s33
    %s37 = sphi 0, %s36
    %s53 = sphi 0, %s37
    %s61 = sphi 0, %s63
    %s64 = sphi 0, %s61
    %s65 = sphi 0, %s64
    %s81 = sphi 0, %s65
    %s89 = sphi 0, %s91
    %s92 = sphi 0, %s89
    %s93 = sphi 0, %s92
    %s109 = sphi 0, %s93
    %s117 = sphi 0, %s119
    %s120 = sphi 0, %s117
    %s121 = sphi 0, %s120
    %s137 = sphi 0, %s121
  $region4: #{diagonal_gaussian_original.1} parent=0 // loop_header_branch
    %12 = sbr.rel (%p10) target = $region8
  $region5: #{diagonal_gaussian_original.1} parent=0 // loop_body
    %s14 = ssub.s32 %s9, 1
    %s15 = ssub.s32 %s9, 2
    %s22 = sadd.s32 1, %s17
    %p23 = scmp.ge.s32.totalorder %s22, 1
    %s24 = scalar_select %p23, 0, %s22
    %s25 = sadd.s32 1, %s16
    %s26 = scalar_select %p23, %s25, %s16
    %p27 = scmp.ge.s32.totalorder %s26, 2
    %s28 = scalar_select %p27, 0, %s26
    %s29 = ssub.s32 %s16, %s28
    %s30 = ssub.s32 %s17, %s24
    %s31 = sor.u32 %s29, %s30
    %p32 = scmp.eq.s32.totalorder %s31, 0
    %s34 = sadd.s32 %s33, 1
    %s35 = scalar_select %p32, %s33, %s34
    %p38 = pneg %p32
    %p39 = scmp.eq.s32.totalorder %s9, 1
    %p40 = por %p38, %p39
    %p41 = scmp.ne.s32.totalorder %s33, %s36
    %p42 = scmp.eq.s32.totalorder %s9, 0
    %p43 = por %p41, %p42
    %p44 = scmp.ne.s32.totalorder %s33, %s36
    %p45 = scmp.eq.s32.totalorder %s14, 1
    %p46 = por %p44, %p45
    %p47 = scmp.ne.s32.totalorder %s36, %s37
    %p48 = scmp.eq.s32.totalorder %s14, 0
    %p49 = por %p47, %p48
    %p50 = scmp.ne.s32.totalorder %s36, %s37
    %p51 = scmp.eq.s32.totalorder %s15, 1
    %p52 = por %p50, %p51
    %p54 = scmp.ne.s32.totalorder %s37, %s53
    %p55 = scmp.eq.s32.totalorder %s15, 0
    %p56 = por %p54, %p55
    %s57 = ssub.s32 %s16, %s28
    %s58 = ssub.s32 %s17, %s24
    %s59 = sor.u32 %s57, %s58
    %p60 = scmp.eq.s32.totalorder %s59, 0
    %s62 = sadd.s32 %s61, 1
    %s63 = scalar_select %p60, %s61, %s62
    %p66 = pneg %p60
    %p67 = scmp.eq.s32.totalorder %s9, 1
    %p68 = por %p66, %p67
    %p69 = scmp.ne.s32.totalorder %s61, %s64
    %p70 = scmp.eq.s32.totalorder %s9, 0
    %p71 = por %p69, %p70
    %p72 = scmp.ne.s32.totalorder %s61, %s64
    %p73 = scmp.eq.s32.totalorder %s14, 1
    %p74 = por %p72, %p73
    %p75 = scmp.ne.s32.totalorder %s64, %s65
    %p76 = scmp.eq.s32.totalorder %s14, 0
    %p77 = por %p75, %p76
    %p78 = scmp.ne.s32.totalorder %s64, %s65
    %p79 = scmp.eq.s32.totalorder %s15, 1
    %p80 = por %p78, %p79
    %p82 = scmp.ne.s32.totalorder %s65, %s81
    %p83 = scmp.eq.s32.totalorder %s15, 0
    %p84 = por %p82, %p83
    %s85 = ssub.s32 %s16, %s28
    %s86 = ssub.s32 %s17, %s24
    %s87 = sor.u32 %s85, %s86
    %p88 = scmp.eq.s32.totalorder %s87, 0
    %s90 = sadd.s32 %s89, 1
    %s91 = scalar_select %p88, %s89, %s90
    %p94 = pneg %p88
    %p95 = scmp.eq.s32.totalorder %s9, 1
    %p96 = por %p94, %p95
    %p97 = scmp.ne.s32.totalorder %s89, %s92
    %p98 = scmp.eq.s32.totalorder %s9, 0
    %p99 = por %p97, %p98
    %p100 = scmp.ne.s32.totalorder %s89, %s92
    %p101 = scmp.eq.s32.totalorder %s14, 1
    %p102 = por %p100, %p101
    %p103 = scmp.ne.s32.totalorder %s92, %s93
    %p104 = scmp.eq.s32.totalorder %s14, 0
    %p105 = por %p103, %p104
    %p106 = scmp.ne.s32.totalorder %s92, %s93
    %p107 = scmp.eq.s32.totalorder %s15, 1
    %p108 = por %p106, %p107
    %p110 = scmp.ne.s32.totalorder %s93, %s109
    %p111 = scmp.eq.s32.totalorder %s15, 0
    %p112 = por %p110, %p111
    %s113 = ssub.s32 %s16, %s28
    %s114 = ssub.s32 %s17, %s24
    %s115 = sor.u32 %s113, %s114
    %p116 = scmp.eq.s32.totalorder %s115, 0
    %s118 = sadd.s32 %s117, 1
    %s119 = scalar_select %p116, %s117, %s118
    %p122 = pneg %p116
    %p123 = scmp.eq.s32.totalorder %s9, 1
    %p124 = por %p122, %p123
    %p125 = scmp.ne.s32.totalorder %s117, %s120
    %p126 = scmp.eq.s32.totalorder %s9, 0
    %p127 = por %p125, %p126
    %p128 = scmp.ne.s32.totalorder %s117, %s120
    %p129 = scmp.eq.s32.totalorder %s14, 1
    %p130 = por %p128, %p129
    %p131 = scmp.ne.s32.totalorder %s120, %s121
    %p132 = scmp.eq.s32.totalorder %s14, 0
    %p133 = por %p131, %p132
    %p134 = scmp.ne.s32.totalorder %s120, %s121
    %p135 = scmp.eq.s32.totalorder %s15, 1
    %p136 = por %p134, %p135
    %p138 = scmp.ne.s32.totalorder %s121, %s137
    %p139 = scmp.eq.s32.totalorder %s15, 0
    %p140 = por %p138, %p139
    %p141 = scmp.le.s32.totalorder 1, %s9
    %p142 = scmp.lt.s32.totalorder %s9, 3
    %p143 = pnand %p141, %p142
    %p144 = pneg %p143
    // Predicated region
    $region9: #{diagonal_gaussian_original.1} parent=5 // pred_check
      _
    $region10: #{diagonal_gaussian_original.1} parent=5 // pred_check_branch
      %146 = sbr.rel (%p143) target = $region12
    $region11: #{diagonal_gaussian_original.1} parent=5 // pred_region
      %s147 = ssub.s32 %s9, 1
    $region12: #{diagonal_gaussian_original.1} parent=5 // pred_fallthru
      _
    %p148 = scmp.lt.s32.totalorder %s9, 2
    // Predicated region
    $region13: #{diagonal_gaussian_original.1} parent=5 // pred_check
      %p149 = pneg %p148
    $region14: #{diagonal_gaussian_original.1} parent=5 // pred_check_branch
      %151 = sbr.rel (%p149) target = $region16
    $region15: #{diagonal_gaussian_original.1} parent=5 // pred_region
      // Predicated region
      $region17: #{diagonal_gaussian_original.1} parent=15 // pred_check
        %p152 = pneg %p43
      $region18: #{diagonal_gaussian_original.1} parent=15 // pred_check_branch
        %154 = sbr.rel (%p152) target = $region20
      $region19: #{diagonal_gaussian_original.1} parent=15 // pred_region
        %p155 = scmp.lt.s32.totalorder %s16, 1
        %s156 = scalar_select %p155, %s16, 1
        %p157 = scmp.lt.s32.totalorder %s17, 0
        %s158 = scalar_select %p157, %s17, 0
        %s159 = smul.addr %s156, 2
        %s160 = sadd.s32 %s158, %s159
        %s161 = smul.addr %s160, 8
        %s162 = scalar_lea.vmem %s0, %s161
      $region20: #{diagonal_gaussian_original.1} parent=15 // pred_fallthru
        _
      // Predicated region
      $region21: #{diagonal_gaussian_original.1} parent=15 // pred_check
        %p163 = pneg %p71
      $region22: #{diagonal_gaussian_original.1} parent=15 // pred_check_branch
        %165 = sbr.rel (%p163) target = $region24
      $region23: #{diagonal_gaussian_original.1} parent=15 // pred_region
        %p166 = scmp.lt.s32.totalorder %s16, 1
        %s167 = scalar_select %p166, %s16, 1
        %p168 = scmp.lt.s32.totalorder %s17, 0
        %s169 = scalar_select %p168, %s17, 0
        %s170 = sadd.s32 %s169, 1
        %s171 = smul.addr %s167, 2
        %s172 = sadd.s32 %s170, %s171
        %s173 = smul.addr %s172, 8
        %s174 = scalar_lea.vmem %s1, %s173
      $region24: #{diagonal_gaussian_original.1} parent=15 // pred_fallthru
        _
      // Predicated region
      $region25: #{diagonal_gaussian_original.1} parent=15 // pred_check
        %p175 = pneg %p99
      $region26: #{diagonal_gaussian_original.1} parent=15 // pred_check_branch
        %177 = sbr.rel (%p175) target = $region28
      $region27: #{diagonal_gaussian_original.1} parent=15 // pred_region
        %p178 = scmp.lt.s32.totalorder %s16, 1
        %s179 = scalar_select %p178, %s16, 1
        %p180 = scmp.lt.s32.totalorder %s17, 0
        %s181 = scalar_select %p180, %s17, 0
        %s182 = sadd.s32 %s181, %s179
        %s183 = smul.addr %s182, 8
        %s184 = scalar_lea.vmem %s2, %s183
      $region28: #{diagonal_gaussian_original.1} parent=15 // pred_fallthru
        _
    $region16: #{diagonal_gaussian_original.1} parent=5 // pred_fallthru
      _
    %p185 = scmp.le.s32.totalorder 1, %s9
    %p186 = scmp.lt.s32.totalorder %s9, 3
    %p187 = pnand %p185, %p186
    %p188 = pneg %p187
    // Predicated region
    $region29: #{diagonal_gaussian_original.1} parent=5 // pred_check
      _
    $region30: #{diagonal_gaussian_original.1} parent=5 // pred_check_branch
      %190 = sbr.rel (%p187) target = $region32
    $region31: #{diagonal_gaussian_original.1} parent=5 // pred_region
      %s191 = ssub.s32 %s9, 1
      %p192 = scmp.lt.s32.totalorder %s18, 1
      %s193 = scalar_select %p192, %s18, 1
      %p194 = scmp.lt.s32.totalorder %s19, 0
      %s195 = scalar_select %p194, %s19, 0
      %s196 = smul.addr %s193, 2
      %s197 = sadd.s32 %s195, %s196
      %s198 = smul.addr %s197, 8
      %s199 = scalar_lea.vmem %s0, %s198
      %p200 = pneg %p49
      %p201 = pneg %p46
      %p202 = scmp.lt.s32.totalorder %s18, 1
      %s203 = scalar_select %p202, %s18, 1
      %p204 = scmp.lt.s32.totalorder %s19, 0
      %s205 = scalar_select %p204, %s19, 0
      %s206 = sadd.s32 %s205, 1
      %s207 = smul.addr %s203, 2
      %s208 = sadd.s32 %s206, %s207
      %s209 = smul.addr %s208, 8
      %s210 = scalar_lea.vmem %s1, %s209
      %p211 = pneg %p77
      %p212 = pneg %p74
      %p213 = scmp.lt.s32.totalorder %s18, 1
      %s214 = scalar_select %p213, %s18, 1
      %p215 = scmp.lt.s32.totalorder %s19, 0
      %s216 = scalar_select %p215, %s19, 0
      %s217 = sadd.s32 %s216, %s214
      %s218 = smul.addr %s217, 8
      %s219 = scalar_lea.vmem %s2, %s218
      %p220 = pneg %p105
      %p221 = pneg %p102
      %p222 = pneg %p133
      %p223 = pneg %p130
      %p224 = scmp.lt.s32.totalorder %s18, 1
      %s225 = scalar_select %p224, %s18, 1
      %p226 = scmp.lt.s32.totalorder %s19, 0
      %s227 = scalar_select %p226, %s19, 0
      %s228 = sadd.s32 %s227, %s225
      %s229 = smul.addr %s228, 8
      %s230 = scalar_lea.vmem %s3, %s229
      %p231 = scmp.lt.s32.totalorder %s18, 1
      %s232 = scalar_select %p231, %s18, 1
      %p233 = scmp.lt.s32.totalorder %s19, 0
      %s234 = scalar_select %p233, %s19, 0
      %s235 = smul.addr %s232, 2
      %s236 = sadd.s32 %s234, %s235
      %s237 = smul.addr %s236, 8
      %s238 = scalar_lea.vmem %s0, %s237
      %p239 = scmp.lt.s32.totalorder %s18, 1
      %s240 = scalar_select %p239, %s18, 1
      %p241 = scmp.lt.s32.totalorder %s19, 0
      %s242 = scalar_select %p241, %s19, 0
      %s243 = sadd.s32 %s242, 1
      %s244 = smul.addr %s240, 2
      %s245 = sadd.s32 %s243, %s244
      %s246 = smul.addr %s245, 8
      %s247 = scalar_lea.vmem %s1, %s246
      %p248 = scmp.lt.s32.totalorder %s18, 1
      %s249 = scalar_select %p248, %s18, 1
      %p250 = scmp.lt.s32.totalorder %s19, 0
      %s251 = scalar_select %p250, %s19, 0
      %s252 = sadd.s32 %s251, %s249
      %s253 = smul.addr %s252, 8
      %s254 = scalar_lea.vmem %s2, %s253
      %p255 = scmp.lt.s32.totalorder %s18, 1
      %s256 = scalar_select %p255, %s18, 1
      %p257 = scmp.lt.s32.totalorder %s19, 0
      %s258 = scalar_select %p257, %s19, 0
      %s259 = sadd.s32 %s258, %s256
      %s260 = smul.addr %s259, 8
      %s261 = scalar_lea.vmem %s3, %s260
      %v262 = vld [vmem:[%s238] sm:$0xff]
      %v263 = vld [vmem:[%s247] sm:$0xff]
      %v264 = vmul.f32 %v263, 0.5
      %v265 = vmul.f32 %v264, 1.442695
      %v266 = vpow.pop %v265
      %v267 = vld [vmem:[%s254] sm:$0xff]
      %v268 = vmul.f32 %v266, %v267
      %v269 = vadd.f32 %v262, %v268
      %270 = vst [vmem:[%s261] sm:$0xff] %v269
      %p271 = scmp.lt.s32.totalorder %s18, 1
      %s272 = scalar_select %p271, %s18, 1
      %p273 = scmp.lt.s32.totalorder %s19, 0
      %s274 = scalar_select %p273, %s19, 0
      %s275 = sadd.s32 %s274, %s272
      %s276 = smul.addr %s275, 8
      %s277 = scalar_lea.vmem %s3, %s276
      // Predicated region
      $region33: #{diagonal_gaussian_original.1} parent=31 // pred_check
        %p278 = pneg %p130
      $region34: #{diagonal_gaussian_original.1} parent=31 // pred_check_branch
        %280 = sbr.rel (%p278) target = $region36
      $region35: #{diagonal_gaussian_original.1} parent=31 // pred_region
        _
      $region36: #{diagonal_gaussian_original.1} parent=31 // pred_fallthru
        _
    $region32: #{diagonal_gaussian_original.1} parent=5 // pred_fallthru
      _
    %p281 = scmp.le.s32.totalorder 2, %s9
    // Predicated region
    $region37: #{diagonal_gaussian_original.1} parent=5 // pred_check
      %p282 = pneg %p281
    $region38: #{diagonal_gaussian_original.1} parent=5 // pred_check_branch
      %284 = sbr.rel (%p282) target = $region40
    $region39: #{diagonal_gaussian_original.1} parent=5 // pred_region
      %s285 = ssub.s32 %s9, 2
      // Predicated region
      $region41: #{diagonal_gaussian_original.1} parent=39 // pred_check
        %p286 = pneg %p136
      $region42: #{diagonal_gaussian_original.1} parent=39 // pred_check_branch
        %288 = sbr.rel (%p286) target = $region44
      $region43: #{diagonal_gaussian_original.1} parent=39 // pred_region
        %p289 = scmp.lt.s32.totalorder %s20, 1
        %s290 = scalar_select %p289, %s20, 1
        %p291 = scmp.lt.s32.totalorder %s21, 0
        %s292 = scalar_select %p291, %s21, 0
        %s293 = sadd.s32 %s292, %s290
        %s294 = smul.addr %s293, 8
        %s295 = scalar_lea.vmem %s3, %s294
      $region44: #{diagonal_gaussian_original.1} parent=39 // pred_fallthru
        _
    $region40: #{diagonal_gaussian_original.1} parent=5 // pred_fallthru
      _
  $region6: #{diagonal_gaussian_original.1} parent=0 // loop_footer
    %s13 = sadd.s32 1, %s9
  $region7: #{diagonal_gaussian_original.1} parent=0 // loop_footer_branch
    %8 = sbr.rel target = $region3
  $region8: #{diagonal_gaussian_original.1} parent=0 // loop_exit
    _

</llo_original>
